<compile_context>
chip_gen: v7x
topology: tpu7x:2x2x1
jax: 0.10.0
libtpu: 0.0.40
codegen_flags: <defaults>
</compile_context>

<pallas_src>
import jax
import jax.numpy as jnp
from jax.experimental import pallas as pl
from jax.experimental.pallas import tpu as pltpu


def _round_up(x, m):
    return ((x + m - 1) // m) * m


def _device_kind():
    try:
        return jax.devices()[0].device_kind.lower()
    except Exception:
        return ""


def _default_row_tile():
    kind = _device_kind()
    # v7x: 64 MiB VMEM / 2 TensorCores -> smaller row tiles; v5e/v6e: 128 MiB VMEM -> bigger tiles.
    if "v7" in kind or "tpu7" in kind:
        return 256
    return 512


def _default_epilogue_dtype():
    kind = _device_kind()
    # v5e (and older) have no bf16 VPU: keep the scale/bias/ReLU epilogue in f32 there.
    if any(t in kind for t in ("v2", "v3", "v4", "v5")):
        return jnp.float32
    return jnp.bfloat16


def _choose_row_tile(rows, max_tile):
    """Pick (tile, rows_padded): prefer no padding, tile % 8 == 0, and >= 2 grid steps (v7x 2 TCs)."""
    if rows < 16:
        return rows, rows                       # single full-row block (block == full dim is legal)
    cap = min(max_tile, rows // 2)
    cap -= cap % 8
    t = cap
    while t >= 8:
        if rows % t == 0:
            return t, rows                      # exact coverage -> no padding copy
        t -= 8
    t = max(8, cap)
    return t, _round_up(rows, t)                # rare fallback: pad rows (junk rows sliced off)


def _choose_k_chunk(k_p, tile, cin, cout_max, c_pad, budget_bytes):
    """Largest multiple-of-8 divisor of k_p keeping per-grid-step VMEM under budget."""
    cin_lanes = _round_up(max(cin, 1), 128)     # lane padding of the (tile, kc, Cin) input block
    per_row = (2 * 2 * cin_lanes                # bf16 input block, double-buffered, lane-padded
               + 4 * cout_max + 2 * cout_max    # f32 matmul acc + bf16 inter-layer activations
               + 4 * c_pad)                     # f32 last-layer acc (pre-max)
    kc_cap = max(8, budget_bytes // max(1, tile * per_row))
    if k_p <= kc_cap:
        return k_p
    kc, d = 8, 8
    while d <= min(k_p, kc_cap):
        if k_p % d == 0:
            kc = d
        d += 8
    return kc


# ----------------------------------------------------------------------------------------------
# Pallas kernel: fused per-point MLP (1x1 conv == channel matmul) + folded BN + ReLU + max-pool
# ----------------------------------------------------------------------------------------------
def _make_sa_kernel(num_layers, epi_dtype):
    def kernel(x_ref, *rest):
        out_ref, mmax_ref = rest[-2], rest[-1]
        p = rest[:-2]                                              # (w, scale, bias) * num_layers
        tile, kc, cin = x_ref.shape

        # (tile, kc, Cin) -> (tile*kc, Cin): leading-dim merge with kc % 8 == 0 -> layout no-op.
        h = x_ref[...].reshape(tile * kc, cin)
        chunk_max = None
        for li in range(num_layers):
            w = p[3 * li][...]                                     # (Cin_l, Cout_l) bf16
            acc = jnp.dot(h, w, preferred_element_type=jnp.float32)  # MXU, f32 accumulation
            if li + 1 < num_layers:
                s = p[3 * li + 1][...]                             # (1, Cout_l) in epilogue dtype
                b = p[3 * li + 2][...]
                a = acc.astype(epi_dtype)
                h = jnp.maximum(a * s + b, 0).astype(jnp.bfloat16)
            else:
                # Max over the group members hoisted AHEAD of the last layer's epilogue
                # (sign(scale) folded into the weight columns in the wrapper).
                c_pad = acc.shape[-1]
                chunk_max = jnp.max(acc.reshape(tile, kc, c_pad), axis=1)   # (tile, C_pad) f32

        j = pl.program_id(1)

        @pl.when(j == 0)
        def _():
            mmax_ref[...] = chunk_max

        @pl.when(j > 0)
        def _():
            mmax_ref[...] = jnp.maximum(mmax_ref[...], chunk_max)

        @pl.when(j == pl.num_programs(1) - 1)
        def _():
            s = p[3 * (num_layers - 1) + 1][...]                   # |scale|, f32, (1, C_pad)
            b = p[3 * (num_layers - 1) + 2][...]
            out_ref[...] = jnp.maximum(mmax_ref[...] * s + b, 0.0).astype(out_ref.dtype)

    return kernel


def set_abstraction_mlp(new_points, weights, scales, biases, *,
                        max_tile=None, out_dtype=jnp.bfloat16, epilogue_dtype=None,
                        k_chunk_budget_bytes=24 << 20):
    """new_points: (B, S, K, C_in) -> (B, S, C_last) via fused (1x1 conv -> BN -> ReLU)* + max_K."""
    B, S, K, Cin = new_points.shape
    num_layers = len(weights)
    C_last = int(weights[-1].shape[1])
    C_pad = _round_up(C_last, 128)              # lane-dense output stores (no masked vst)
    if max_tile is None:
        max_tile = _default_row_tile()
    if epilogue_dtype is None:
        epilogue_dtype = _default_epilogue_dtype()

    rows = B * S
    tile, rows_p = _choose_row_tile(rows, max_tile)

    # Grouped features already arrive in bf16 from sample_and_group (cast below is a no-op).
    x = new_points.astype(jnp.bfloat16).reshape(rows, K, Cin)
    K_p = _round_up(K, 8)
    if K_p != K:
        # Pad the group axis by repeating the last group member: a duplicate of a real point,
        # so the max over K is unchanged.
        x = jnp.pad(x, ((0, 0), (0, K_p - K), (0, 0)), mode="edge")
    if rows_p != rows:
        # Rare fallback (rows has no good multiple-of-8 divisor); junk rows are sliced off below.
        x = jnp.pad(x, ((0, rows_p - rows), (0, 0), (0, 0)))

    cout_max = max(int(w.shape[1]) for w in weights)
    kc = _choose_k_chunk(K_p, tile, Cin, cout_max, C_pad, k_chunk_budget_bytes)
    nkc = K_p // kc

    params = []
    in_specs = [pl.BlockSpec((tile, kc, Cin), lambda i, j: (i, j, 0))]
    for li, (w, s, b) in enumerate(zip(weights, scales, biases)):
        w = jnp.asarray(w, jnp.float32)
        s = jnp.asarray(s, jnp.float32).reshape(-1)
        b = jnp.asarray(b, jnp.float32).reshape(-1)
        ci, co = int(w.shape[0]), int(w.shape[1])
        if li == num_layers - 1:
            # Fold sign(scale) into the weight columns so max over K commutes with the epilogue:
            #   max_k ReLU(z_k*s + b) == ReLU(max_k(z_k*sign(s)) * |s| + b).
            sign = jnp.sign(s)
            w = w * sign[None, :]
            s = jnp.abs(s)
            if co != C_pad:                      # zero-padded lanes stay 0 after ReLU(0*0+0)
                w = jnp.pad(w, ((0, 0), (0, C_pad - co)))
                s = jnp.pad(s, (0, C_pad - co))
                b = jnp.pad(b, (0, C_pad - co))
                co = C_pad
            s = s.reshape(1, co).astype(jnp.float32)
            b = b.reshape(1, co).astype(jnp.float32)
        else:
            s = s.reshape(1, co).astype(epilogue_dtype)
            b = b.reshape(1, co).astype(epilogue_dtype)
        params += [w.astype(jnp.bfloat16), s, b]
        # Grid-invariant parameters: constant index_map -> fetched once, reused every grid step.
        in_specs += [pl.BlockSpec((ci, co), lambda i, j: (0, 0)),
                     pl.BlockSpec((1, co), lambda i, j: (0, 0)),
                     pl.BlockSpec((1, co), lambda i, j: (0, 0))]

    flops = 2 * rows_p * K_p * sum(int(w.shape[0]) * int(w.shape[1]) for w in weights)
    bytes_accessed = (x.size * x.dtype.itemsize
                      + sum(int(q.size) * q.dtype.itemsize for q in params)
                      + rows_p * C_pad * jnp.dtype(out_dtype).itemsize)

    out = pl.pallas_call(
        _make_sa_kernel(num_layers, epilogue_dtype),
        out_shape=jax.ShapeDtypeStruct((rows_p, C_pad), out_dtype),
        grid=(rows_p // tile, nkc),
        in_specs=in_specs,
        out_specs=pl.BlockSpec((tile, C_pad), lambda i, j: (i, 0)),
        scratch_shapes=[pltpu.VMEM((tile, C_pad), jnp.float32)],
        compiler_params=pltpu.CompilerParams(
            dimension_semantics=("parallel", "arbitrary"),
            vmem_limit_bytes=48 * 1024 * 1024),
        cost_estimate=pl.CostEstimate(flops=flops, transcendentals=0,
                                      bytes_accessed=bytes_accessed),
    )(x, *params)
    return out[:rows, :C_last].reshape(B, S, C_last)


# ----------------------------------------------------------------------------------------------
# Plain-JAX glue: sampling / grouping (data-dependent sort + gathers, no clean Pallas equivalent)
# ----------------------------------------------------------------------------------------------
def square_distance(src, dst):
    dist = -2.0 * jnp.einsum("bnc,bmc->bnm", src, dst)
    dist += jnp.sum(src ** 2, -1)[:, :, None]
    dist += jnp.sum(dst ** 2, -1)[:, None, :]
    return dist


def farthest_point_sample(xyz, npoint):
    B, N, _ = xyz.shape

    def body(i, state):
        centroids, distance, farthest = state
        centroids = centroids.at[:, i].set(farthest)
        centroid = jnp.take_along_axis(xyz, farthest[:, None, None], axis=1)   # (B,1,3)
        dist = jnp.sum((xyz - centroid) ** 2, -1)
        distance = jnp.minimum(distance, dist)
        farthest = jnp.argmax(distance, -1).astype(jnp.int32)
        return centroids, distance, farthest

    # TODO(synk): torch seeds `farthest` with randint(0, N); we use a deterministic start of 0.
    init = (jnp.zeros((B, npoint), jnp.int32),
            jnp.full((B, N), 1e10, jnp.float32),
            jnp.zeros((B,), jnp.int32))
    centroids, _, _ = jax.lax.fori_loop(0, npoint, body, init)
    return centroids


def index_points(points, idx):
    B = points.shape[0]
    C = points.shape[-1]
    idx_flat = idx.reshape(B, -1)
    g = jnp.take_along_axis(points, idx_flat[..., None], axis=1)
    return g.reshape(idx.shape + (C,))


def query_ball_point(radius, nsample, xyz, new_xyz):
    B, N, _ = xyz.shape
    sqrdists = square_distance(new_xyz, xyz)                        # (B,S,N)
    group_idx = jnp.broadcast_to(jnp.arange(N, dtype=jnp.int32), sqrdists.shape)
    group_idx = jnp.where(sqrdists > radius ** 2, N, group_idx)
    group_idx = jnp.sort(group_idx, axis=-1)[:, :, :nsample]
    group_first = group_idx[:, :, :1]
    # Guard: if even the closest candidate is outside the radius, fall back to index 0.
    group_first = jnp.where(group_first == N, 0, group_first)
    group_idx = jnp.where(group_idx == N, group_first, group_idx)
    return group_idx


def sample_and_group(npoint, radius, nsample, xyz, points, feature_dtype=jnp.bfloat16):
    # Geometry (FPS / ball query) stays in f32; gathered features are materialized in bf16 so the
    # largest (grouped) tensor needs no separate cast pass before the Pallas kernel.
    fps_idx = farthest_point_sample(xyz, npoint)                    # (B,S)
    new_xyz = index_points(xyz, fps_idx)                            # (B,S,3)
    idx = query_ball_point(radius, nsample, xyz, new_xyz)           # (B,S,K)
    grouped_xyz = index_points(xyz, idx)                            # (B,S,K,3)
    grouped_xyz_norm = (grouped_xyz - new_xyz[:, :, None, :]).astype(feature_dtype)
    if points is not None:
        grouped_points = index_points(points.astype(feature_dtype), idx)
        new_points = jnp.concatenate([grouped_xyz_norm, grouped_points], axis=-1)
    else:
        new_points = grouped_xyz_norm
    return new_xyz, new_points


def sample_and_group_all(xyz, points, feature_dtype=jnp.bfloat16):
    B, N, C = xyz.shape
    new_xyz = jnp.zeros((B, 1, C), xyz.dtype)
    grouped_xyz = xyz[:, None, :, :].astype(feature_dtype)
    if points is not None:
        new_points = jnp.concatenate(
            [grouped_xyz, points[:, None, :, :].astype(feature_dtype)], axis=-1)
    else:
        new_points = grouped_xyz
    return new_xyz, new_points


# ----------------------------------------------------------------------------------------------
# Module
# ----------------------------------------------------------------------------------------------
class PointNetSetAbstraction:
    def __init__(self, npoint, radius, nsample, in_channel, mlp, group_all, key):
        self.npoint = npoint
        self.radius = radius
        self.nsample = nsample
        self.group_all = group_all
        self.weights, self.scales, self.biases = [], [], []
        last = in_channel
        eps = 1e-5
        for out_ch in mlp:
            key, k1, k2, k3, k4, k5, k6 = jax.random.split(key, 7)
            # Conv2d(last, out_ch, kernel=1): weight (out_ch, last), bias (out_ch,)
            w = jax.random.normal(k1, (out_ch, last), jnp.float32) / jnp.sqrt(float(last))
            b_conv = 0.1 * jax.random.normal(k2, (out_ch,), jnp.float32)
            # BatchNorm2d in eval mode (running stats), folded into per-channel scale/bias.
            gamma = 1.0 + 0.1 * jax.random.normal(k3, (out_ch,), jnp.float32)
            beta = 0.1 * jax.random.normal(k4, (out_ch,), jnp.float32)
            run_mean = 0.1 * jax.random.normal(k5, (out_ch,), jnp.float32)
            run_var = jnp.abs(1.0 + 0.1 * jax.random.normal(k6, (out_ch,), jnp.float32))
            scale = gamma / jnp.sqrt(run_var + eps)
            bias = beta + scale * (b_conv - run_mean)
            self.weights.append(jnp.asarray(w.T))        # (C_in, C_out) for the kernel matmul
            self.scales.append(scale)
            self.biases.append(bias)
            last = out_ch

    def __call__(self, xyz, points):
        # xyz: (B, 3, N), points: (B, D, N)  -- channel-first as in the PyTorch module
        xyz = jnp.transpose(xyz, (0, 2, 1))
        if points is not None:
            points = jnp.transpose(points, (0, 2, 1))
        if self.group_all:
            new_xyz, new_points = sample_and_group_all(xyz, points)
        else:
            new_xyz, new_points = sample_and_group(
                self.npoint, self.radius, self.nsample, xyz, points)
        # new_points: (B, S, K, C_in) bf16.  PyTorch permutes to (B, C_in, K, S), applies the
        # 1x1-conv/BN/ReLU stack, then max over K.  Same math, fused in one Pallas kernel.
        feat = set_abstraction_mlp(new_points, self.weights, self.scales, self.biases)
        new_points_out = jnp.transpose(feat, (0, 2, 1))   # (B, C_last, S), bf16
        new_xyz_out = jnp.transpose(new_xyz, (0, 2, 1))   # (B, 3, S)
        return new_xyz_out, new_points_out


def _reference_mlp(new_points, weights, scales, biases, epilogue_dtype, out_dtype=jnp.bfloat16):
    """Pure-jnp replay of the fused kernel's exact recipe (dtypes, sign-folded hoisted max)."""
    B, S, K, Cin = new_points.shape
    n = len(weights)
    h = new_points.reshape(-1, Cin).astype(jnp.bfloat16)
    for li in range(n - 1):
        acc = jnp.dot(h, weights[li].astype(jnp.bfloat16), preferred_element_type=jnp.float32)
        a = acc.astype(epilogue_dtype)
        h = jnp.maximum(a * scales[li].astype(epilogue_dtype)[None, :]
                        + biases[li].astype(epilogue_dtype)[None, :], 0).astype(jnp.bfloat16)
    sign = jnp.sign(scales[-1])
    z = jnp.dot(h, (weights[-1] * sign[None, :]).astype(jnp.bfloat16),
                preferred_element_type=jnp.float32)
    z = jnp.max(z.reshape(B, S, K, -1), axis=2)
    out = jnp.maximum(z * jnp.abs(scales[-1])[None, None, :] + biases[-1][None, None, :], 0.0)
    return out.astype(out_dtype)


if __name__ == "__main__":
    key = jax.random.PRNGKey(0)
    kx, kp, kparam = jax.random.split(key, 3)
    B, N, D = 2, 32, 3
    xyz = jax.random.normal(kx, (B, 3, N), jnp.float32)
    points = jax.random.normal(kp, (B, D, N), jnp.float32)

    sa = PointNetSetAbstraction(npoint=8, radius=1.0, nsample=8,
                                in_channel=3 + D, mlp=[16, 32],
                                group_all=False, key=kparam)

    new_xyz, new_points = sa(xyz, points)
    jax.block_until_ready((new_xyz, new_points))
    assert new_xyz.shape == (B, 3, 8), new_xyz.shape
    assert new_points.shape == (B, 32, 8), new_points.shape

    # Correctness: replay the exact kernel recipe (bf16 matmuls, f32 accumulation, hoisted max)
    # in plain jnp and compare.
    xyz_t = jnp.transpose(xyz, (0, 2, 1))
    pts_t = jnp.transpose(points, (0, 2, 1))
    _, grouped = sample_and_group(sa.npoint, sa.radius, sa.nsample, xyz_t, pts_t)
    ref = _reference_mlp(grouped, sa.weights, sa.scales, sa.biases, _default_epilogue_dtype())
    ref = jnp.transpose(ref.astype(jnp.float32), (0, 2, 1))          # (B, C_last, S)
    err = float(jnp.max(jnp.abs(ref - new_points.astype(jnp.float32))))
    assert err < 5e-2, f"max abs error vs same-recipe reference: {err}"

    print("KERNEL_OK")
</pallas_src>

<mosaic_0001>
module attributes {stable_mosaic.version = 11 : i64} {
  func.func @kernel(%arg0: i32, %arg1: i32, %arg2: memref<8x8x6xbf16, #tpu.memory_space<vmem>>, %arg3: memref<6x16xbf16, #tpu.memory_space<vmem>>, %arg4: memref<1x16xbf16, #tpu.memory_space<vmem>>, %arg5: memref<1x16xbf16, #tpu.memory_space<vmem>>, %arg6: memref<16x128xbf16, #tpu.memory_space<vmem>>, %arg7: memref<1x128xf32, #tpu.memory_space<vmem>>, %arg8: memref<1x128xf32, #tpu.memory_space<vmem>>, %arg9: memref<8x128xbf16, #tpu.memory_space<vmem>>, %arg10: memref<8x128xf32, #tpu.memory_space<vmem>>) attributes {dimension_semantics = [#tpu.dimension_semantics<parallel>, #tpu.dimension_semantics<arbitrary>], iteration_bounds = array<i64: 2, 1>, scalar_prefetch = 0 : i64, scratch_operands = 1 : i64, tpu.core_type = #tpu.core_type<tc>, window_params = [{transform_indices = @transform_0, window_bounds = array<i64: 8, 8, 6>}, {pipeline_mode = #tpu.pipeline_mode<synchronous>, transform_indices = @transform_1, window_bounds = array<i64: 6, 16>}, {pipeline_mode = #tpu.pipeline_mode<synchronous>, transform_indices = @transform_2, window_bounds = array<i64: 1, 16>}, {pipeline_mode = #tpu.pipeline_mode<synchronous>, transform_indices = @transform_3, window_bounds = array<i64: 1, 16>}, {pipeline_mode = #tpu.pipeline_mode<synchronous>, transform_indices = @transform_4, window_bounds = array<i64: 16, 128>}, {pipeline_mode = #tpu.pipeline_mode<synchronous>, transform_indices = @transform_5, window_bounds = array<i64: 1, 128>}, {pipeline_mode = #tpu.pipeline_mode<synchronous>, transform_indices = @transform_6, window_bounds = array<i64: 1, 128>}, {transform_indices = @transform_7, window_bounds = array<i64: 8, 128>}]} {
    %c0 = arith.constant 0 : index
    %c0_0 = arith.constant 0 : index
    %c0_1 = arith.constant 0 : index
    %0 = vector.load %arg2[%c0, %c0_0, %c0_1] : memref<8x8x6xbf16, #tpu.memory_space<vmem>>, vector<8x8x6xbf16>
    %1 = vector.shape_cast %0 : vector<8x8x6xbf16> to vector<64x6xbf16>
    %c0_2 = arith.constant 0 : index
    %c0_3 = arith.constant 0 : index
    %2 = vector.load %arg3[%c0_2, %c0_3] : memref<6x16xbf16, #tpu.memory_space<vmem>>, vector<6x16xbf16>
    %cst = arith.constant dense<0.000000e+00> : vector<64x16xf32>
    %3 = tpu.matmul %1, %2, %cst {dimension_numbers = #tpu.dot_dimension_numbers<[1], [0], [0], [1], [0, 0, 1, 1], [], []>} : vector<64x6xbf16>, vector<6x16xbf16>, vector<64x16xf32> -> vector<64x16xf32>
    %c0_4 = arith.constant 0 : index
    %c0_5 = arith.constant 0 : index
    %4 = vector.load %arg4[%c0_4, %c0_5] : memref<1x16xbf16, #tpu.memory_space<vmem>>, vector<1x16xbf16>
    %c0_6 = arith.constant 0 : index
    %c0_7 = arith.constant 0 : index
    %5 = vector.load %arg5[%c0_6, %c0_7] : memref<1x16xbf16, #tpu.memory_space<vmem>>, vector<1x16xbf16>
    %6 = arith.truncf %3 : vector<64x16xf32> to vector<64x16xbf16>
    %7 = vector.broadcast %4 : vector<1x16xbf16> to vector<64x16xbf16>
    %8 = arith.mulf %6, %7 : vector<64x16xbf16>
    %9 = vector.broadcast %5 : vector<1x16xbf16> to vector<64x16xbf16>
    %10 = arith.addf %8, %9 : vector<64x16xbf16>
    %cst_8 = arith.constant 0.000000e+00 : bf16
    %11 = vector.broadcast %cst_8 : bf16 to vector<64x16xbf16>
    %12 = arith.maximumf %10, %11 : vector<64x16xbf16>
    %c0_9 = arith.constant 0 : index
    %c0_10 = arith.constant 0 : index
    %13 = vector.load %arg6[%c0_9, %c0_10] : memref<16x128xbf16, #tpu.memory_space<vmem>>, vector<16x128xbf16>
    %cst_11 = arith.constant dense<0.000000e+00> : vector<64x128xf32>
    %14 = tpu.matmul %12, %13, %cst_11 {dimension_numbers = #tpu.dot_dimension_numbers<[1], [0], [0], [1], [0, 0, 1, 1], [], []>} : vector<64x16xbf16>, vector<16x128xbf16>, vector<64x128xf32> -> vector<64x128xf32>
    %15 = vector.shape_cast %14 : vector<64x128xf32> to vector<8x8x128xf32>
    %cst_12 = arith.constant dense<0xFF800000> : vector<8x128xf32>
    %16 = vector.multi_reduction <maximumf>, %15, %cst_12 [1] : vector<8x8x128xf32> to vector<8x128xf32>
    %c0_i32 = arith.constant 0 : i32
    %17 = arith.cmpi eq, %arg1, %c0_i32 : i32
    %18 = arith.extui %17 : i1 to i32
    %c0_i32_13 = arith.constant 0 : i32
    %19 = arith.cmpi ne, %18, %c0_i32_13 : i32
    scf.if %19 {
      %c0_18 = arith.constant 0 : index
      %c0_19 = arith.constant 0 : index
      %26 = vector.load %arg10[%c0_18, %c0_19] : memref<8x128xf32, #tpu.memory_space<vmem>>, vector<8x128xf32>
      tpu.vector_store %arg10[%c0_18, %c0_19], %16 {strides = array<i32>} : memref<8x128xf32, #tpu.memory_space<vmem>>, vector<8x128xf32>,
    } else {
    }
    %c0_i32_14 = arith.constant 0 : i32
    %20 = arith.cmpi sgt, %arg1, %c0_i32_14 : i32
    %21 = arith.extui %20 : i1 to i32
    %c0_i32_15 = arith.constant 0 : i32
    %22 = arith.cmpi ne, %21, %c0_i32_15 : i32
    scf.if %22 {
      %c0_18 = arith.constant 0 : index
      %c0_19 = arith.constant 0 : index
      %26 = vector.load %arg10[%c0_18, %c0_19] : memref<8x128xf32, #tpu.memory_space<vmem>>, vector<8x128xf32>
      %27 = arith.maximumf %26, %16 : vector<8x128xf32>
      %c0_20 = arith.constant 0 : index
      %c0_21 = arith.constant 0 : index
      %28 = vector.load %arg10[%c0_20, %c0_21] : memref<8x128xf32, #tpu.memory_space<vmem>>, vector<8x128xf32>
      tpu.vector_store %arg10[%c0_20, %c0_21], %27 {strides = array<i32>} : memref<8x128xf32, #tpu.memory_space<vmem>>, vector<8x128xf32>,
    } else {
    }
    %c0_i32_16 = arith.constant 0 : i32
    %23 = arith.cmpi eq, %arg1, %c0_i32_16 : i32
    %24 = arith.extui %23 : i1 to i32
    %c0_i32_17 = arith.constant 0 : i32
    %25 = arith.cmpi ne, %24, %c0_i32_17 : i32
    scf.if %25 {
      %c0_18 = arith.constant 0 : index
      %c0_19 = arith.constant 0 : index
      %26 = vector.load %arg7[%c0_18, %c0_19] : memref<1x128xf32, #tpu.memory_space<vmem>>, vector<1x128xf32>
      %c0_20 = arith.constant 0 : index
      %c0_21 = arith.constant 0 : index
      %27 = vector.load %arg8[%c0_20, %c0_21] : memref<1x128xf32, #tpu.memory_space<vmem>>, vector<1x128xf32>
      %c0_22 = arith.constant 0 : index
      %c0_23 = arith.constant 0 : index
      %28 = vector.load %arg10[%c0_22, %c0_23] : memref<8x128xf32, #tpu.memory_space<vmem>>, vector<8x128xf32>
      %29 = vector.broadcast %26 : vector<1x128xf32> to vector<8x128xf32>
      %30 = arith.mulf %28, %29 : vector<8x128xf32>
      %31 = vector.broadcast %27 : vector<1x128xf32> to vector<8x128xf32>
      %32 = arith.addf %30, %31 : vector<8x128xf32>
      %cst_24 = arith.constant 0.000000e+00 : f32
      %33 = vector.broadcast %cst_24 : f32 to vector<8x128xf32>
      %34 = arith.maximumf %32, %33 : vector<8x128xf32>
      %35 = arith.truncf %34 : vector<8x128xf32> to vector<8x128xbf16>
      %c0_25 = arith.constant 0 : index
      %c0_26 = arith.constant 0 : index
      %36 = vector.load %arg9[%c0_25, %c0_26] : memref<8x128xbf16, #tpu.memory_space<vmem>>, vector<8x128xbf16>
      tpu.vector_store %arg9[%c0_25, %c0_26], %35 {strides = array<i32>} : memref<8x128xbf16, #tpu.memory_space<vmem>>, vector<8x128xbf16>,
    } else {
    }
    return
  }
  func.func @transform_0(%arg0: i32, %arg1: i32) -> (i32, i32, i32) {
    %c0_i32 = arith.constant 0 : i32
    %c0_i32_0 = arith.constant 0 : i32
    return %arg0, %arg1, %c0_i32 : i32, i32, i32
  }
  func.func @transform_1(%arg0: i32, %arg1: i32) -> (i32, i32) {
    %c0_i32 = arith.constant 0 : i32
    %c0_i32_0 = arith.constant 0 : i32
    %c0_i32_1 = arith.constant 0 : i32
    return %c0_i32, %c0_i32_0 : i32, i32
  }
  func.func @transform_2(%arg0: i32, %arg1: i32) -> (i32, i32) {
    %c0_i32 = arith.constant 0 : i32
    %c0_i32_0 = arith.constant 0 : i32
    %c0_i32_1 = arith.constant 0 : i32
    return %c0_i32, %c0_i32_0 : i32, i32
  }
  func.func @transform_3(%arg0: i32, %arg1: i32) -> (i32, i32) {
    %c0_i32 = arith.constant 0 : i32
    %c0_i32_0 = arith.constant 0 : i32
    %c0_i32_1 = arith.constant 0 : i32
    return %c0_i32, %c0_i32_0 : i32, i32
  }
  func.func @transform_4(%arg0: i32, %arg1: i32) -> (i32, i32) {
    %c0_i32 = arith.constant 0 : i32
    %c0_i32_0 = arith.constant 0 : i32
    %c0_i32_1 = arith.constant 0 : i32
    return %c0_i32, %c0_i32_0 : i32, i32
  }
  func.func @transform_5(%arg0: i32, %arg1: i32) -> (i32, i32) {
    %c0_i32 = arith.constant 0 : i32
    %c0_i32_0 = arith.constant 0 : i32
    %c0_i32_1 = arith.constant 0 : i32
    return %c0_i32, %c0_i32_0 : i32, i32
  }
  func.func @transform_6(%arg0: i32, %arg1: i32) -> (i32, i32) {
    %c0_i32 = arith.constant 0 : i32
    %c0_i32_0 = arith.constant 0 : i32
    %c0_i32_1 = arith.constant 0 : i32
    return %c0_i32, %c0_i32_0 : i32, i32
  }
  func.func @transform_7(%arg0: i32, %arg1: i32) -> (i32, i32) {
    %c0_i32 = arith.constant 0 : i32
    %c0_i32_0 = arith.constant 0 : i32
    return %arg0, %c0_i32 : i32, i32
  }
}

</mosaic_0001>

<llo_original>
// kernel: tpu_custom_call.1
$region0: #{tpu_custom_call.1}
  #allocation0 [shape = 'u32[]', space=smem, size = 0x4, offset = 0x4, fixed_abs, tag = 'smem constant byte address 0x4 - core index']
  #allocation1 [shape = 'u32[144,128]{1,0:T(1,128)}', space=vmem, size = 0x12000, scoped, tag = 'internal scratch']
  #allocation2 [shape = 'f32[8,128]{1,0:T(8,128)}', space=vmem, size = 0x1000, scoped, tag = 'scratch operand']
  %s0 = inlined_call_operand.vmem [shape: bf16[16,8,6], index: 0, kind: input, shape index: {}]
  %s1 = inlined_call_operand.vmem [shape: bf16[6,16], index: 1, kind: input, shape index: {}]
  %s2 = inlined_call_operand.vmem [shape: bf16[1,16], index: 2, kind: input, shape index: {}]
  %s3 = inlined_call_operand.vmem [shape: bf16[1,16], index: 3, kind: input, shape index: {}]
  %s4 = inlined_call_operand.vmem [shape: bf16[16,128], index: 4, kind: input, shape index: {}]
  %s5 = inlined_call_operand.vmem [shape: f32[1,128], index: 5, kind: input, shape index: {}]
  %s6 = inlined_call_operand.vmem [shape: f32[1,128], index: 6, kind: input, shape index: {}]
  %s7 = inlined_call_operand.hbm [shape: bf16[16,128], index: 7, kind: output, shape index: {}]
  %s8 = sld [smem:[#allocation0]]
  $region73: #{tpu_custom_call.1} parent=0
    _
  %s10 = ssub.s32 1, %s8
  %s11 = scalar_select 0, %s10, %s8
  $region1: #{tpu_custom_call.1} parent=0
    #allocation3 [shape = 'u8[4096]{0}', space=vmem, size = 0x1000, scoped, tag = 'output window, operand 0']
    #allocation4 [shape = 's32[2]{0}', space=sflag, size = 0x8, scoped, tag = 'scoped memory for tpu_custom_call.1']
    %12 = vsyncpa [#allocation4], 0
    %s13 = scalar_lea.sflag [#allocation4], 1
    %14 = vsyncpa %s13, 0
    loop: start=0, step=1, limit=4
    $region2: #{tpu_custom_call.1} parent=1 // loop_pre_header
      _
    $region3: #{tpu_custom_call.1} parent=1 // loop_header
      %s16 = sphi 0, %s20
      %p17 = scmp.ge.s32.totalorder %s16, 4
      %s23 = sphi 0, %s35
      %s24 = sphi 0, %s31
      %s25 = sphi 0, %s23
      %s26 = sphi 0, %s24
      %s27 = sphi 0, %s25
      %s28 = sphi 0, %s26
      %s40 = sphi 0, %s42
      %s43 = sphi 0, %s40
      %s44 = sphi 0, %s43
      %s60 = sphi 0, %s44
      %s64 = sphi 0, %s64
      %s66 = sphi 0, %s64
      %s67 = sphi 0, %s66
      %s81 = sphi 0, %s67
      %s85 = sphi 0, %s85
      %s87 = sphi 0, %s85
      %s88 = sphi 0, %s87
      %s102 = sphi 0, %s88
      %s106 = sphi 0, %s106
      %s108 = sphi 0, %s106
      %s109 = sphi 0, %s108
      %s123 = sphi 0, %s109
      %s127 = sphi 0, %s127
      %s129 = sphi 0, %s127
      %s130 = sphi 0, %s129
      %s144 = sphi 0, %s130
      %s148 = sphi 0, %s148
      %s150 = sphi 0, %s148
      %s151 = sphi 0, %s150
      %s165 = sphi 0, %s151
      %s169 = sphi 0, %s169
      %s171 = sphi 0, %s169
      %s172 = sphi 0, %s171
      %s186 = sphi 0, %s172
      %s192 = sphi 0, %s194
      %s195 = sphi 0, %s192
      %s196 = sphi 0, %s195
      %s212 = sphi 0, %s196
    $region4: #{tpu_custom_call.1} parent=1 // loop_header_branch
      %19 = sbr.rel (%p17) target = $region8
    $region5: #{tpu_custom_call.1} parent=1 // loop_body
      %s21 = ssub.s32 %s16, 1
      %s22 = ssub.s32 %s16, 2
      %s29 = sadd.s32 1, %s24
      %p30 = scmp.ge.s32.totalorder %s29, 1
      %s31 = scalar_select %p30, 0, %s29
      %s32 = sadd.s32 1, %s23
      %s33 = scalar_select %p30, %s32, %s23
      %p34 = scmp.ge.s32.totalorder %s33, 2
      %s35 = scalar_select %p34, 0, %s33
      %s36 = ssub.s32 %s23, %s35
      %s37 = ssub.s32 %s24, %s31
      %s38 = sor.u32 %s36, %s37
      %p39 = scmp.eq.s32.totalorder %s38, 0
      %s41 = sadd.s32 %s40, 1
      %s42 = scalar_select %p39, %s40, %s41
      %p45 = pneg %p39
      %p46 = scmp.eq.s32.totalorder %s16, 1
      %p47 = por %p45, %p46
      %p48 = scmp.ne.s32.totalorder %s40, %s43
      %p49 = scmp.eq.s32.totalorder %s16, 0
      %p50 = por %p48, %p49
      %p51 = scmp.ne.s32.totalorder %s40, %s43
      %p52 = scmp.eq.s32.totalorder %s21, 1
      %p53 = por %p51, %p52
      %p54 = scmp.ne.s32.totalorder %s43, %s44
      %p55 = scmp.eq.s32.totalorder %s21, 0
      %p56 = por %p54, %p55
      %p57 = scmp.ne.s32.totalorder %s43, %s44
      %p58 = scmp.eq.s32.totalorder %s22, 1
      %p59 = por %p57, %p58
      %p61 = scmp.ne.s32.totalorder %s44, %s60
      %p62 = scmp.eq.s32.totalorder %s22, 0
      %p63 = por %p61, %p62
      %s65 = sadd.s32 %s64, 1
      %p68 = scmp.eq.s32.totalorder %s16, 1
      %p69 = scmp.ne.s32.totalorder %s64, %s66
      %p70 = scmp.eq.s32.totalorder %s16, 0
      %p71 = por %p69, %p70
      %p72 = scmp.ne.s32.totalorder %s64, %s66
      %p73 = scmp.eq.s32.totalorder %s21, 1
      %p74 = por %p72, %p73
      %p75 = scmp.ne.s32.totalorder %s66, %s67
      %p76 = scmp.eq.s32.totalorder %s21, 0
      %p77 = por %p75, %p76
      %p78 = scmp.ne.s32.totalorder %s66, %s67
      %p79 = scmp.eq.s32.totalorder %s22, 1
      %p80 = por %p78, %p79
      %p82 = scmp.ne.s32.totalorder %s67, %s81
      %p83 = scmp.eq.s32.totalorder %s22, 0
      %p84 = por %p82, %p83
      %s86 = sadd.s32 %s85, 1
      %p89 = scmp.eq.s32.totalorder %s16, 1
      %p90 = scmp.ne.s32.totalorder %s85, %s87
      %p91 = scmp.eq.s32.totalorder %s16, 0
      %p92 = por %p90, %p91
      %p93 = scmp.ne.s32.totalorder %s85, %s87
      %p94 = scmp.eq.s32.totalorder %s21, 1
      %p95 = por %p93, %p94
      %p96 = scmp.ne.s32.totalorder %s87, %s88
      %p97 = scmp.eq.s32.totalorder %s21, 0
      %p98 = por %p96, %p97
      %p99 = scmp.ne.s32.totalorder %s87, %s88
      %p100 = scmp.eq.s32.totalorder %s22, 1
      %p101 = por %p99, %p100
      %p103 = scmp.ne.s32.totalorder %s88, %s102
      %p104 = scmp.eq.s32.totalorder %s22, 0
      %p105 = por %p103, %p104
      %s107 = sadd.s32 %s106, 1
      %p110 = scmp.eq.s32.totalorder %s16, 1
      %p111 = scmp.ne.s32.totalorder %s106, %s108
      %p112 = scmp.eq.s32.totalorder %s16, 0
      %p113 = por %p111, %p112
      %p114 = scmp.ne.s32.totalorder %s106, %s108
      %p115 = scmp.eq.s32.totalorder %s21, 1
      %p116 = por %p114, %p115
      %p117 = scmp.ne.s32.totalorder %s108, %s109
      %p118 = scmp.eq.s32.totalorder %s21, 0
      %p119 = por %p117, %p118
      %p120 = scmp.ne.s32.totalorder %s108, %s109
      %p121 = scmp.eq.s32.totalorder %s22, 1
      %p122 = por %p120, %p121
      %p124 = scmp.ne.s32.totalorder %s109, %s123
      %p125 = scmp.eq.s32.totalorder %s22, 0
      %p126 = por %p124, %p125
      %s128 = sadd.s32 %s127, 1
      %p131 = scmp.eq.s32.totalorder %s16, 1
      %p132 = scmp.ne.s32.totalorder %s127, %s129
      %p133 = scmp.eq.s32.totalorder %s16, 0
      %p134 = por %p132, %p133
      %p135 = scmp.ne.s32.totalorder %s127, %s129
      %p136 = scmp.eq.s32.totalorder %s21, 1
      %p137 = por %p135, %p136
      %p138 = scmp.ne.s32.totalorder %s129, %s130
      %p139 = scmp.eq.s32.totalorder %s21, 0
      %p140 = por %p138, %p139
      %p141 = scmp.ne.s32.totalorder %s129, %s130
      %p142 = scmp.eq.s32.totalorder %s22, 1
      %p143 = por %p141, %p142
      %p145 = scmp.ne.s32.totalorder %s130, %s144
      %p146 = scmp.eq.s32.totalorder %s22, 0
      %p147 = por %p145, %p146
      %s149 = sadd.s32 %s148, 1
      %p152 = scmp.eq.s32.totalorder %s16, 1
      %p153 = scmp.ne.s32.totalorder %s148, %s150
      %p154 = scmp.eq.s32.totalorder %s16, 0
      %p155 = por %p153, %p154
      %p156 = scmp.ne.s32.totalorder %s148, %s150
      %p157 = scmp.eq.s32.totalorder %s21, 1
      %p158 = por %p156, %p157
      %p159 = scmp.ne.s32.totalorder %s150, %s151
      %p160 = scmp.eq.s32.totalorder %s21, 0
      %p161 = por %p159, %p160
      %p162 = scmp.ne.s32.totalorder %s150, %s151
      %p163 = scmp.eq.s32.totalorder %s22, 1
      %p164 = por %p162, %p163
      %p166 = scmp.ne.s32.totalorder %s151, %s165
      %p167 = scmp.eq.s32.totalorder %s22, 0
      %p168 = por %p166, %p167
      %s170 = sadd.s32 %s169, 1
      %p173 = scmp.eq.s32.totalorder %s16, 1
      %p174 = scmp.ne.s32.totalorder %s169, %s171
      %p175 = scmp.eq.s32.totalorder %s16, 0
      %p176 = por %p174, %p175
      %p177 = scmp.ne.s32.totalorder %s169, %s171
      %p178 = scmp.eq.s32.totalorder %s21, 1
      %p179 = por %p177, %p178
      %p180 = scmp.ne.s32.totalorder %s171, %s172
      %p181 = scmp.eq.s32.totalorder %s21, 0
      %p182 = por %p180, %p181
      %p183 = scmp.ne.s32.totalorder %s171, %s172
      %p184 = scmp.eq.s32.totalorder %s22, 1
      %p185 = por %p183, %p184
      %p187 = scmp.ne.s32.totalorder %s172, %s186
      %p188 = scmp.eq.s32.totalorder %s22, 0
      %p189 = por %p187, %p188
      %s190 = ssub.s32 %s23, %s35
      %p191 = scmp.eq.s32.totalorder %s190, 0
      %s193 = sadd.s32 %s192, 1
      %s194 = scalar_select %p191, %s192, %s193
      %p197 = pneg %p191
      %p198 = scmp.eq.s32.totalorder %s16, 1
      %p199 = por %p197, %p198
      %p200 = scmp.ne.s32.totalorder %s192, %s195
      %p201 = scmp.eq.s32.totalorder %s16, 0
      %p202 = por %p200, %p201
      %p203 = scmp.ne.s32.totalorder %s192, %s195
      %p204 = scmp.eq.s32.totalorder %s21, 1
      %p205 = por %p203, %p204
      %p206 = scmp.ne.s32.totalorder %s195, %s196
      %p207 = scmp.eq.s32.totalorder %s21, 0
      %p208 = por %p206, %p207
      %p209 = scmp.ne.s32.totalorder %s195, %s196
      %p210 = scmp.eq.s32.totalorder %s22, 1
      %p211 = por %p209, %p210
      %p213 = scmp.ne.s32.totalorder %s196, %s212
      %p214 = scmp.eq.s32.totalorder %s22, 0
      %p215 = por %p213, %p214
      %p216 = scmp.le.s32.totalorder 1, %s16
      %p217 = scmp.lt.s32.totalorder %s16, 3
      %p218 = pnand %p216, %p217
      %p219 = pneg %p218
      // Predicated region
      $region9: #{tpu_custom_call.1} parent=5 // pred_check
        _
      $region10: #{tpu_custom_call.1} parent=5 // pred_check_branch
        %221 = sbr.rel (%p218) target = $region12
      $region11: #{tpu_custom_call.1} parent=5 // pred_region
        %s222 = ssub.s32 %s16, 1
        // Predicated region
        $region13: #{tpu_custom_call.1} parent=11 // pred_check
          %p223 = pneg %p77
        $region14: #{tpu_custom_call.1} parent=11 // pred_check_branch
          %225 = sbr.rel (%p223) target = $region16
        $region15: #{tpu_custom_call.1} parent=11 // pred_region
          _
        $region16: #{tpu_custom_call.1} parent=11 // pred_fallthru
          _
        // Predicated region
        $region17: #{tpu_custom_call.1} parent=11 // pred_check
          %p226 = pneg %p98
        $region18: #{tpu_custom_call.1} parent=11 // pred_check_branch
          %228 = sbr.rel (%p226) target = $region20
        $region19: #{tpu_custom_call.1} parent=11 // pred_region
          _
        $region20: #{tpu_custom_call.1} parent=11 // pred_fallthru
          _
        // Predicated region
        $region21: #{tpu_custom_call.1} parent=11 // pred_check
          %p229 = pneg %p119
        $region22: #{tpu_custom_call.1} parent=11 // pred_check_branch
          %231 = sbr.rel (%p229) target = $region24
        $region23: #{tpu_custom_call.1} parent=11 // pred_region
          _
        $region24: #{tpu_custom_call.1} parent=11 // pred_fallthru
          _
        // Predicated region
        $region25: #{tpu_custom_call.1} parent=11 // pred_check
          %p232 = pneg %p140
        $region26: #{tpu_custom_call.1} parent=11 // pred_check_branch
          %234 = sbr.rel (%p232) target = $region28
        $region27: #{tpu_custom_call.1} parent=11 // pred_region
          _
        $region28: #{tpu_custom_call.1} parent=11 // pred_fallthru
          _
        // Predicated region
        $region29: #{tpu_custom_call.1} parent=11 // pred_check
          %p235 = pneg %p161
        $region30: #{tpu_custom_call.1} parent=11 // pred_check_branch
          %237 = sbr.rel (%p235) target = $region32
        $region31: #{tpu_custom_call.1} parent=11 // pred_region
          _
        $region32: #{tpu_custom_call.1} parent=11 // pred_fallthru
          _
        // Predicated region
        $region33: #{tpu_custom_call.1} parent=11 // pred_check
          %p238 = pneg %p182
        $region34: #{tpu_custom_call.1} parent=11 // pred_check_branch
          %240 = sbr.rel (%p238) target = $region36
        $region35: #{tpu_custom_call.1} parent=11 // pred_region
          _
        $region36: #{tpu_custom_call.1} parent=11 // pred_fallthru
          _
      $region12: #{tpu_custom_call.1} parent=5 // pred_fallthru
        _
      %p241 = scmp.lt.s32.totalorder %s16, 2
      // Predicated region
      $region37: #{tpu_custom_call.1} parent=5 // pred_check
        %p242 = pneg %p241
      $region38: #{tpu_custom_call.1} parent=5 // pred_check_branch
        %244 = sbr.rel (%p242) target = $region40
      $region39: #{tpu_custom_call.1} parent=5 // pred_region
        // Predicated region
        $region41: #{tpu_custom_call.1} parent=39 // pred_check
          %p245 = pneg %p50
        $region42: #{tpu_custom_call.1} parent=39 // pred_check_branch
          %247 = sbr.rel (%p245) target = $region44
        $region43: #{tpu_custom_call.1} parent=39 // pred_region
          %s248 = smul.u32 8, %s23
          %p249 = scmp.lt.s32.totalorder %s248, 15
          %s250 = scalar_select %p249, %s248, 15
          %p251 = scmp.lt.s32.totalorder %s24, 0
          %s252 = scalar_select %p251, %s24, 0
          %s253 = sadd.s32 %s252, %s250
          %s254 = smul.addr %s253, 4
          %s255 = scalar_lea.vmem %s0, %s254
          %s256 = smul.u32 8, %s23
        $region44: #{tpu_custom_call.1} parent=39 // pred_fallthru
          _
      $region40: #{tpu_custom_call.1} parent=5 // pred_fallthru
        _
      %p257 = scmp.le.s32.totalorder 1, %s16
      %p258 = scmp.lt.s32.totalorder %s16, 3
      %p259 = pnand %p257, %p258
      %p260 = pneg %p259
      // Predicated region
      $region45: #{tpu_custom_call.1} parent=5 // pred_check
        _
      $region46: #{tpu_custom_call.1} parent=5 // pred_check_branch
        %262 = sbr.rel (%p259) target = $region48
      $region47: #{tpu_custom_call.1} parent=5 // pred_region
        %s263 = ssub.s32 %s16, 1
        %s264 = smul.u32 8, %s25
        %p265 = scmp.lt.s32.totalorder %s264, 15
        %s266 = scalar_select %p265, %s264, 15
        %p267 = scmp.lt.s32.totalorder %s26, 0
        %s268 = scalar_select %p267, %s26, 0
        %s269 = sadd.s32 %s268, %s266
        %s270 = smul.addr %s269, 4
        %s271 = scalar_lea.vmem %s0, %s270
        %p272 = pneg %p56
        %p273 = pneg %p53
        %p274 = pneg %p77
        %p275 = pneg %p74
        %p276 = pneg %p98
        %p277 = pneg %p95
        %p278 = pneg %p119
        %p279 = pneg %p116
        %p280 = pneg %p140
        %p281 = pneg %p137
        %p282 = pneg %p161
        %p283 = pneg %p158
        %p284 = pneg %p182
        %p285 = pneg %p179
        %p286 = pneg %p208
        %p287 = pneg %p205
        %s288 = sand.u32 %s195, 1
        %s289 = scalar_lea.sflag [#allocation4], %s288
        %s290 = sand.u32 %s195, 1
        %s291 = smul.addr %s290, 4
        %s292 = scalar_lea.vmem [#allocation3], %s291
        %s293 = smul.u32 8, %s25
        %p294 = scmp.lt.s32.totalorder %s293, 15
        %s295 = scalar_select %p294, %s293, 15
        %p296 = scmp.lt.s32.totalorder %s26, 0
        %s297 = scalar_select %p296, %s26, 0
        %s298 = sadd.s32 %s297, %s295
        %s299 = smul.addr %s298, 4
        %s300 = scalar_lea.vmem %s0, %s299
        %s301 = smul.u32 8, %s25
        %v303 = vld [vmem:[%s300] sm:$0xf]
        %v304 = vld [vmem:[%s300 + $0x4] sm:$0xf]
        %v305 = vld [vmem:[%s300 + $0x8] sm:$0xf]
        %v306 = vld [vmem:[%s300 + $0xc] sm:$0xf]
        %v307 = vld [vmem:[%s300 + $0x10] sm:$0xf]
        %v308 = vld [vmem:[%s300 + $0x14] sm:$0xf]
        %v309 = vld [vmem:[%s300 + $0x18] sm:$0xf]
        %v310 = vld [vmem:[%s300 + $0x1c] sm:$0xf]
        %v311 = vld [vmem:[%s1] sm:$0x7]
        %v320 = vunpack.c.l.b16 %v303
        %v321 = vunpack.c.l.b16 %v304
        %v322 = vunpack.c.l.b16 %v305
        %v323 = vunpack.c.l.b16 %v306
        %v324 = vunpack.c.l.b16 %v307
        %v325 = vunpack.c.l.b16 %v308
        %v326 = vunpack.c.l.b16 %v309
        %v327 = vunpack.c.l.b16 %v310
        %v328 = vpack.c.b16 %v321, %v320
        %v329 = vpack.c.b16 %v323, %v322
        %v330 = vpack.c.b16 %v325, %v324
        %v331 = vpack.c.b16 %v327, %v326
        %vm332 = vcmask 48128
        %v334 = vsel %vm332, %v328, 0
        %v337 = vsel %vm332, %v329, 0
        %v340 = vsel %vm332, %v330, 0
        %v343 = vsel %vm332, %v331, 0
        %vm345 = vcmask 1042432
        %v347 = vsel %vm345, %v311, 0
        %349 = vmatprep.subr.bf16.mxu0 0
        %350 = vmatpush1.bf16.msra.mxu0 %v347
        %351 = vmatprep.subr.bf16.mxu0 0
        %352 = vmatpush1.bf16.msra.mxu0 0
        %353 = vmatprep.subr.bf16.mxu0 0
        %354 = vmatpush1.bf16.msra.mxu0 0
        %355 = vmatprep.subr.bf16.mxu0 0
        %356 = vmatpush1.bf16.msra.mxu0 0
        %357 = vmatprep.subr.bf16.mxu0 0
        %358 = vmatpush1.bf16.msra.mxu0 0
        %359 = vmatprep.subr.bf16.mxu0 0
        %360 = vmatpush1.bf16.msra.mxu0 0
        %361 = vmatprep.subr.bf16.mxu0 0
        %362 = vmatpush1.bf16.msra.mxu0 0
        %363 = vmatprep.subr.bf16.mxu0 0
        %364 = vmatpush1.bf16.msra.mxu0 0
        %365 = vmatprep.subr.bf16.mxu0 0
        %366 = vmatpush1.bf16.msra.mxu0 0
        %367 = vmatprep.subr.bf16.mxu0 0
        %368 = vmatpush1.bf16.msra.mxu0 0
        %369 = vmatprep.subr.bf16.mxu0 0
        %370 = vmatpush1.bf16.msra.mxu0 0
        %371 = vmatprep.subr.bf16.mxu0 0
        %372 = vmatpush1.bf16.msra.mxu0 0
        %373 = vmatprep.subr.bf16.mxu0 0
        %374 = vmatpush1.bf16.msra.mxu0 0
        %375 = vmatprep.subr.bf16.mxu0 0
        %376 = vmatpush1.bf16.msra.mxu0 0
        %377 = vmatprep.subr.bf16.mxu0 0
        %378 = vmatpush1.bf16.msra.mxu0 0
        %379 = vmatprep.subr.bf16.mxu0 0
        %380 = vmatpush1.bf16.msra.mxu0 0
        %381 = vmatprep.mubr.bf16.mxu0 0
        %382 = vmatmul.mubr.bf16.gmra.mrb[0].mxu0 %v334
        %v383 = vpop.f32.mrb[0].mxu0
        %v384 = vadd.f32 0.0, %v383
        %v385 = vpop.f32.mrb[0].mxu0
        %v386 = vpop.f32.mrb[0].mxu0
        %v387 = vadd.f32 0.0, %v386
        %v388 = vpop.f32.mrb[0].mxu0
        %389 = vmatprep.mubr.bf16.mxu0 0
        %390 = vmatmul.mubr.bf16.gmra.mrb[0].mxu0 %v337
        %v391 = vpop.f32.mrb[0].mxu0
        %v392 = vadd.f32 0.0, %v391
        %v393 = vpop.f32.mrb[0].mxu0
        %v394 = vpop.f32.mrb[0].mxu0
        %v395 = vadd.f32 0.0, %v394
        %v396 = vpop.f32.mrb[0].mxu0
        %397 = vmatprep.mubr.bf16.mxu0 0
        %398 = vmatmul.mubr.bf16.gmra.mrb[0].mxu0 %v340
        %v399 = vpop.f32.mrb[0].mxu0
        %v400 = vadd.f32 0.0, %v399
        %v401 = vpop.f32.mrb[0].mxu0
        %v402 = vpop.f32.mrb[0].mxu0
        %v403 = vadd.f32 0.0, %v402
        %v404 = vpop.f32.mrb[0].mxu0
        %405 = vmatprep.mubr.bf16.mxu0 0
        %406 = vmatmul.mubr.bf16.gmra.mrb[0].mxu0 %v343
        %v407 = vpop.f32.mrb[0].mxu0
        %v408 = vadd.f32 0.0, %v407
        %v409 = vpop.f32.mrb[0].mxu0
        %v410 = vpop.f32.mrb[0].mxu0
        %v411 = vadd.f32 0.0, %v410
        %v412 = vpop.f32.mrb[0].mxu0
        %413 = vdwg.mxu0
        %v414 = vld [vmem:[%s2] sm:$0x1]
        %v415 = vld [vmem:[%s3] sm:$0x1]
        %v416 = vpack.c.bf16 %v387, %v384
        %v417 = vpack.c.bf16 %v395, %v392
        %v418 = vpack.c.bf16 %v403, %v400
        %v419 = vpack.c.bf16 %v411, %v408
        %v421 = vpack.i.b16 %v414, %v414
        %v423 = vlaneseq
        %v424 = vshrl.u32 %v423, 7
        %v425 = vsub.s32 0, %v424
        %v426 = vrot.slane %v421, %v425
        %v427 = vmul.bf16 %v416, %v426
        %v428 = vmul.bf16 %v417, %v426
        %v429 = vmul.bf16 %v418, %v426
        %v430 = vmul.bf16 %v419, %v426
        %v432 = vpack.i.b16 %v415, %v415
        %v434 = vlaneseq
        %v435 = vshrl.u32 %v434, 7
        %v436 = vsub.s32 0, %v435
        %v437 = vrot.slane %v432, %v436
        %v438 = vadd.bf16 %v427, %v437
        %v439 = vadd.bf16 %v428, %v437
        %v440 = vadd.bf16 %v429, %v437
        %v441 = vadd.bf16 %v430, %v437
        %v442 = vmax.bf16 %v438, 0
        %v443 = vmax.bf16 %v439, 0
        %v444 = vmax.bf16 %v440, 0
        %v445 = vmax.bf16 %v441, 0
        %v446 = vld [vmem:[%s4] sm:$0xf]
        %v447 = vld [vmem:[%s4 + $0x4] sm:$0xf]
        %v450 = vunpack.c.l.b16 %v446
        %v451 = vunpack.c.l.b16 %v447
        %v452 = vpack.c.b16 %v451, %v450
        %vm454 = vcmask 130048
        %v456 = vsel %vm454, %v442, 0
        %v459 = vsel %vm454, %v443, 0
        %v462 = vsel %vm454, %v444, 0
        %v465 = vsel %vm454, %v445, 0
        %467 = vmatprep.subr.bf16.mxu0 0
        %468 = vmatpush1.bf16.msra.mxu0 %v452
        %469 = vmatprep.subr.bf16.mxu0 0
        %470 = vmatpush1.bf16.msra.mxu0 0
        %471 = vmatprep.subr.bf16.mxu0 0
        %472 = vmatpush1.bf16.msra.mxu0 0
        %473 = vmatprep.subr.bf16.mxu0 0
        %474 = vmatpush1.bf16.msra.mxu0 0
        %475 = vmatprep.subr.bf16.mxu0 0
        %476 = vmatpush1.bf16.msra.mxu0 0
        %477 = vmatprep.subr.bf16.mxu0 0
        %478 = vmatpush1.bf16.msra.mxu0 0
        %479 = vmatprep.subr.bf16.mxu0 0
        %480 = vmatpush1.bf16.msra.mxu0 0
        %481 = vmatprep.subr.bf16.mxu0 0
        %482 = vmatpush1.bf16.msra.mxu0 0
        %483 = vmatprep.subr.bf16.mxu0 0
        %484 = vmatpush1.bf16.msra.mxu0 0
        %485 = vmatprep.subr.bf16.mxu0 0
        %486 = vmatpush1.bf16.msra.mxu0 0
        %487 = vmatprep.subr.bf16.mxu0 0
        %488 = vmatpush1.bf16.msra.mxu0 0
        %489 = vmatprep.subr.bf16.mxu0 0
        %490 = vmatpush1.bf16.msra.mxu0 0
        %491 = vmatprep.subr.bf16.mxu0 0
        %492 = vmatpush1.bf16.msra.mxu0 0
        %493 = vmatprep.subr.bf16.mxu0 0
        %494 = vmatpush1.bf16.msra.mxu0 0
        %495 = vmatprep.subr.bf16.mxu0 0
        %496 = vmatpush1.bf16.msra.mxu0 0
        %497 = vmatprep.subr.bf16.mxu0 0
        %498 = vmatpush1.bf16.msra.mxu0 0
        %499 = vmatprep.mubr.bf16.mxu0 0
        %500 = vmatmul.mubr.bf16.gmra.mrb[0].mxu0 %v456
        %v501 = vpop.f32.mrb[0].mxu0
        %v502 = vadd.f32 0.0, %v501
        %v503 = vpop.f32.mrb[0].mxu0
        %v504 = vpop.f32.mrb[0].mxu0
        %v505 = vadd.f32 0.0, %v504
        %v506 = vpop.f32.mrb[0].mxu0
        %507 = vmatprep.mubr.bf16.mxu0 0
        %508 = vmatmul.mubr.bf16.gmra.mrb[0].mxu0 %v459
        %v509 = vpop.f32.mrb[0].mxu0
        %v510 = vadd.f32 0.0, %v509
        %v511 = vpop.f32.mrb[0].mxu0
        %v512 = vpop.f32.mrb[0].mxu0
        %v513 = vadd.f32 0.0, %v512
        %v514 = vpop.f32.mrb[0].mxu0
        %515 = vmatprep.mubr.bf16.mxu0 0
        %516 = vmatmul.mubr.bf16.gmra.mrb[0].mxu0 %v462
        %v517 = vpop.f32.mrb[0].mxu0
        %v518 = vadd.f32 0.0, %v517
        %v519 = vpop.f32.mrb[0].mxu0
        %v520 = vpop.f32.mrb[0].mxu0
        %v521 = vadd.f32 0.0, %v520
        %v522 = vpop.f32.mrb[0].mxu0
        %523 = vmatprep.mubr.bf16.mxu0 0
        %524 = vmatmul.mubr.bf16.gmra.mrb[0].mxu0 %v465
        %v525 = vpop.f32.mrb[0].mxu0
        %v526 = vadd.f32 0.0, %v525
        %v527 = vpop.f32.mrb[0].mxu0
        %v528 = vpop.f32.mrb[0].mxu0
        %v529 = vadd.f32 0.0, %v528
        %v530 = vpop.f32.mrb[0].mxu0
        %531 = vdwg.mxu0
        %v532 = vrot.slane %v502, 4
        %v533 = vmax.f32 %v502, %v532
        %v534 = vrot.slane %v533, 2
        %v535 = vmax.f32 %v533, %v534
        %v536 = vrot.slane %v535, 1
        %v537 = vmax.f32 %v535, %v536
        %v538 = vrot.slane %v505, 4
        %v539 = vmax.f32 %v505, %v538
        %v540 = vrot.slane %v539, 2
        %v541 = vmax.f32 %v539, %v540
        %v542 = vrot.slane %v541, 1
        %v543 = vmax.f32 %v541, %v542
        %v544 = vrot.slane %v510, 4
        %v545 = vmax.f32 %v510, %v544
        %v546 = vrot.slane %v545, 2
        %v547 = vmax.f32 %v545, %v546
        %v548 = vrot.slane %v547, 1
        %v549 = vmax.f32 %v547, %v548
        %v550 = vrot.slane %v513, 4
        %v551 = vmax.f32 %v513, %v550
        %v552 = vrot.slane %v551, 2
        %v553 = vmax.f32 %v551, %v552
        %v554 = vrot.slane %v553, 1
        %v555 = vmax.f32 %v553, %v554
        %v556 = vrot.slane %v518, 4
        %v557 = vmax.f32 %v518, %v556
        %v558 = vrot.slane %v557, 2
        %v559 = vmax.f32 %v557, %v558
        %v560 = vrot.slane %v559, 1
        %v561 = vmax.f32 %v559, %v560
        %v562 = vrot.slane %v521, 4
        %v563 = vmax.f32 %v521, %v562
        %v564 = vrot.slane %v563, 2
        %v565 = vmax.f32 %v563, %v564
        %v566 = vrot.slane %v565, 1
        %v567 = vmax.f32 %v565, %v566
        %v568 = vrot.slane %v526, 4
        %v569 = vmax.f32 %v526, %v568
        %v570 = vrot.slane %v569, 2
        %v571 = vmax.f32 %v569, %v570
        %v572 = vrot.slane %v571, 1
        %v573 = vmax.f32 %v571, %v572
        %v574 = vrot.slane %v529, 4
        %v575 = vmax.f32 %v529, %v574
        %v576 = vrot.slane %v575, 2
        %v577 = vmax.f32 %v575, %v576
        %v578 = vrot.slane %v577, 1
        %v579 = vmax.f32 %v577, %v578
        %p580 = scmp.eq.s32.totalorder %s26, 0
        // Predicated region
        $region49: #{tpu_custom_call.1} parent=47 // pred_check
          %p581 = pneg %p580
        $region50: #{tpu_custom_call.1} parent=47 // pred_check_branch
          %583 = sbr.rel (%p581) target = $region52
        $region51: #{tpu_custom_call.1} parent=47 // pred_region
          %vm592 = vcmask 1041409
          %v593 = vsel %vm592, %v543, %v537
          %vm594 = vcmask 1042434
          %v595 = vsel %vm594, %v549, %v593
          %vm596 = vcmask 1043459
          %v597 = vsel %vm596, %v555, %v595
          %vm598 = vcmask 1044484
          %v599 = vsel %vm598, %v561, %v597
          %vm600 = vcmask 1045509
          %v601 = vsel %vm600, %v567, %v599
          %vm602 = vcmask 1046534
          %v603 = vsel %vm602, %v573, %v601
          %vm604 = vcmask 1047559
          %v605 = vsel %vm604, %v579, %v603
          %607 = vst [vmem:[#allocation2] sm:$0xff] %v605
        $region52: #{tpu_custom_call.1} parent=47 // pred_fallthru
          _
        %p608 = scmp.gt.s32.totalorder %s26, 0
        // Predicated region
        $region53: #{tpu_custom_call.1} parent=47 // pred_check
          %p609 = pneg %p608
        $region54: #{tpu_custom_call.1} parent=47 // pred_check_branch
          %611 = sbr.rel (%p609) target = $region56
        $region55: #{tpu_custom_call.1} parent=47 // pred_region
          %v612 = vld [vmem:[#allocation2] sm:$0xff]
          %vm621 = vcmask 1041409
          %v622 = vsel %vm621, %v543, %v537
          %vm623 = vcmask 1042434
          %v624 = vsel %vm623, %v549, %v622
          %vm625 = vcmask 1043459
          %v626 = vsel %vm625, %v555, %v624
          %vm627 = vcmask 1044484
          %v628 = vsel %vm627, %v561, %v626
          %vm629 = vcmask 1045509
          %v630 = vsel %vm629, %v567, %v628
          %vm631 = vcmask 1046534
          %v632 = vsel %vm631, %v573, %v630
          %vm633 = vcmask 1047559
          %v634 = vsel %vm633, %v579, %v632
          %v636 = vmax.f32 %v612, %v634
          %637 = vst [vmem:[#allocation2] sm:$0xff] %v636
        $region56: #{tpu_custom_call.1} parent=47 // pred_fallthru
          _
        // Predicated region
        $region57: #{tpu_custom_call.1} parent=47 // pred_check
          %p638 = pneg %p580
        $region58: #{tpu_custom_call.1} parent=47 // pred_check_branch
          %640 = sbr.rel (%p638) target = $region60
        $region59: #{tpu_custom_call.1} parent=47 // pred_region
          %v641 = vld [vmem:[%s5] sm:$0x1]
          %v642 = vld [vmem:[%s6] sm:$0x1]
          %v643 = vld [vmem:[#allocation2] sm:$0xff]
          %v645 = vlaneseq
          %v646 = vshrl.u32 %v645, 7
          %v647 = vsub.s32 0, %v646
          %v648 = vrot.slane %v641, %v647
          %v650 = vmul.f32 %v643, %v648
          %v652 = vlaneseq
          %v653 = vshrl.u32 %v652, 7
          %v654 = vsub.s32 0, %v653
          %v655 = vrot.slane %v642, %v654
          %v657 = vadd.f32 %v650, %v655
          %v658 = vmax.f32 %v657, 0.0
          %v659 = vpack.c.bf16 %v658, %v658
          %660 = vst [vmem:[%s292] sm:$0xf] %v659
        $region60: #{tpu_custom_call.1} parent=47 // pred_fallthru
          _
        %s661 = sand.u32 %s195, 1
        %s662 = scalar_lea.sflag [#allocation4], %s661
        %s663 = sand.u32 %s195, 1
        %s664 = smul.addr %s663, 4
        %s665 = scalar_lea.vmem [#allocation3], %s664
        // Predicated region
        $region61: #{tpu_custom_call.1} parent=47 // pred_check
          %p666 = pneg %p205
        $region62: #{tpu_custom_call.1} parent=47 // pred_check_branch
          %668 = sbr.rel (%p666) target = $region64
        $region63: #{tpu_custom_call.1} parent=47 // pred_region
          %s670 = ssub.s32 64, 64
          %671 = vsyncadd %s662, %s670
          %s672 = smul.addr %s25, 64
          %s673 = scalar_lea.hbm %s7, %s672
          %s675 = sshll.u32 %s665, 4
          %s676 = int_to_ptr.vmem [resolvable:$true] %s675
          %678 = dma.vmem_to_hbm [thread:$0]  %s676, 64, %s673, %s662
        $region64: #{tpu_custom_call.1} parent=47 // pred_fallthru
          _
      $region48: #{tpu_custom_call.1} parent=5 // pred_fallthru
        _
      %p679 = scmp.le.s32.totalorder 2, %s16
      // Predicated region
      $region65: #{tpu_custom_call.1} parent=5 // pred_check
        %p680 = pneg %p679
      $region66: #{tpu_custom_call.1} parent=5 // pred_check_branch
        %682 = sbr.rel (%p680) target = $region68
      $region67: #{tpu_custom_call.1} parent=5 // pred_region
        %s683 = ssub.s32 %s16, 2
        // Predicated region
        $region69: #{tpu_custom_call.1} parent=67 // pred_check
          %p684 = pneg %p211
        $region70: #{tpu_custom_call.1} parent=67 // pred_check_branch
          %686 = sbr.rel (%p684) target = $region72
        $region71: #{tpu_custom_call.1} parent=67 // pred_region
          %s687 = sand.u32 %s196, 1
          %s688 = scalar_lea.sflag [#allocation4], %s687
          %s689 = sand.u32 %s196, 1
          %s690 = smul.addr %s689, 4
          %s691 = scalar_lea.vmem [#allocation3], %s690
          %692 = dma.done %s688, 64
        $region72: #{tpu_custom_call.1} parent=67 // pred_fallthru
          _
      $region68: #{tpu_custom_call.1} parent=5 // pred_fallthru
        _
    $region6: #{tpu_custom_call.1} parent=1 // loop_footer
      %s20 = sadd.s32 1, %s16
    $region7: #{tpu_custom_call.1} parent=1 // loop_footer_branch
      %15 = sbr.rel target = $region3
    $region8: #{tpu_custom_call.1} parent=1 // loop_exit
      _
    %693 = vsyncpa [#allocation4], 1
    %s694 = scalar_lea.sflag [#allocation4], 1
    %695 = vsyncpa %s694, 1

</llo_original>
